<compile_context>
chip_gen: v5e
topology: v5e:2x2
jax: 0.10.0
libtpu: 0.0.40
codegen_flags: <defaults>
</compile_context>

<pallas_src>
import functools

import jax
import jax.numpy as jnp
from jax.experimental import pallas as pl
from jax.experimental.pallas import tpu as pltpu


def _ce_kernel(preds_ref, targets_ref, loss_ref, m_ref, l_ref, t_ref,
               *, c_total, ragged):
    # preds_ref:   (TN, TC) logits tile (native dtype), cast to f32 in-kernel
    # targets_ref: (TN, 1)  int32 class indices (-1 marks padded / invalid rows)
    # loss_ref:    (TN, 1)  f32 per-row loss (written on the last class tile)
    # m/l/t_ref:   (TN, 1)  f32 scratch: running max / running exp-sum / target logit
    ci = pl.program_id(1)
    num_c = pl.num_programs(1)

    @pl.when(ci == 0)
    def _():
        m_ref[...] = jnp.full_like(m_ref, -jnp.inf)
        l_ref[...] = jnp.zeros_like(l_ref)
        t_ref[...] = jnp.zeros_like(t_ref)

    x = preds_ref[...].astype(jnp.float32)          # (TN, TC)
    tgt = targets_ref[...]                          # (TN, 1) int32
    tn, tc = x.shape

    # grid-invariant local column iota (reused for class mask + target gather)
    col = jax.lax.broadcasted_iota(jnp.int32, (tn, tc), 1)

    if ragged:
        # mask columns beyond the true class count (only the last class tile
        # is actually ragged; for earlier tiles c_rem >= tc so this is a no-op)
        c_rem = c_total - ci * tc
        x = jnp.where(col < c_rem, x, -jnp.inf)

    # --- online log-sum-exp over class tiles (numerically stable) ---
    m_prev = m_ref[...]
    m_new = jnp.maximum(m_prev, jnp.max(x, axis=-1, keepdims=True))
    # guard: if every logit seen so far is -inf, avoid exp(-inf - -inf) = NaN
    m_safe = jnp.where(m_new == -jnp.inf, 0.0, m_new)
    alpha = jnp.exp(m_prev - m_safe)
    p = jnp.exp(x - m_safe)
    l_ref[...] = alpha * l_ref[...] + jnp.sum(p, axis=-1, keepdims=True)
    m_ref[...] = m_new

    # --- accumulate the target logit: local column == (target - tile offset) ---
    tgt_local = tgt - ci * tc                       # (TN, 1) per-row subtract
    t_ref[...] += jnp.sum(jnp.where(col == tgt_local, x, 0.0),
                          axis=-1, keepdims=True)

    @pl.when(ci == num_c - 1)
    def _():
        lse = m_ref[...] + jnp.log(l_ref[...])      # (TN, 1)
        # jnp.where (not mult-by-zero) so NaN/Inf garbage in padded rows is
        # sanitized rather than propagated.
        loss_ref[...] = jnp.where(tgt >= 0, lse - t_ref[...], 0.0)


def _round_up(v, m):
    return (v + m - 1) // m * m


def cross_entropy(preds, targets, *, block_n=None, block_c=None):
    """preds: (N, C) float logits (any float dtype); targets: (N,) int class indices.
    Returns scalar mean cross-entropy loss (same semantics as F.cross_entropy
    with default arguments)."""
    n, c = preds.shape
    targets = targets.astype(jnp.int32)
    itemsize = jnp.dtype(preds.dtype).itemsize

    # --- class-axis tile (lane dim) ---
    if block_c is None:
        block_c = 2048
    if block_c >= c:
        block_c = c                          # single class tile, full dim (always legal)
    else:
        block_c = _round_up(block_c, 128)    # multiple of 128 lanes
    grid_c = pl.cdiv(c, block_c)
    ragged_c = (c % block_c) != 0

    # --- row-axis tile: keep double-buffered logits tiles around 8-16 MiB ---
    logits_budget = 16 * 1024 * 1024         # 2 buffers -> <= 8 MiB per logits tile
    if block_n is None:
        block_n = logits_budget // (2 * block_c * itemsize)
        block_n = max(16, min(1024, block_n))
    # keep at least 2 row tiles so both v7x TensorCores get work on the parallel axis
    if n >= 64:
        block_n = min(block_n, _round_up(-(-n // 2), 16))
    if block_n >= n:
        block_n = n                          # single row tile, full dim (always legal)
    else:
        block_n = max(16, (block_n // 16) * 16)   # multiple of 16 (bf16 sublane packing)
    grid_n = pl.cdiv(n, block_n)

    # --- only the tiny targets array is padded (sentinel -1 marks invalid rows);
    #     the logits are streamed unpadded, ragged blocks handled in-kernel. ---
    n_rows_pad = grid_n * block_n
    targets2d = jnp.pad(targets, (0, n_rows_pad - n),
                        constant_values=-1).reshape(n_rows_pad, 1)

    # --- explicit VMEM budget: double-buffered logits tile plus the lane-padded
    #     (block_n, 1) targets/loss blocks and the 3 f32 scratch accumulators ---
    needed = (2 * block_n * block_c * itemsize      # logits (double-buffered)
              + 2 * block_n * 128 * 4               # targets block (lane-padded, x2)
              + 2 * block_n * 128 * 4               # loss block (lane-padded, x2)
              + 3 * block_n * 128 * 4)              # f32 scratch accumulators
    vmem_limit = int(min(60 * 1024 * 1024,
                         max(32 * 1024 * 1024, needed + (8 << 20))))

    kernel = functools.partial(_ce_kernel, c_total=c, ragged=ragged_c)

    per_row = pl.pallas_call(
        kernel,
        out_shape=jax.ShapeDtypeStruct((n_rows_pad, 1), jnp.float32),
        grid_spec=pltpu.PrefetchScalarGridSpec(
            num_scalar_prefetch=0,
            grid=(grid_n, grid_c),
            in_specs=[
                pl.BlockSpec((block_n, block_c), lambda i, j: (i, j)),
                pl.BlockSpec((block_n, 1), lambda i, j: (i, 0)),
            ],
            out_specs=pl.BlockSpec((block_n, 1), lambda i, j: (i, 0)),
            scratch_shapes=[
                pltpu.VMEM((block_n, 1), jnp.float32),   # running max
                pltpu.VMEM((block_n, 1), jnp.float32),   # running exp-sum
                pltpu.VMEM((block_n, 1), jnp.float32),   # target logit
            ],
        ),
        compiler_params=pltpu.CompilerParams(
            dimension_semantics=("parallel", "arbitrary"),
            vmem_limit_bytes=vmem_limit,
        ),
        cost_estimate=pl.CostEstimate(
            flops=int(5 * n * c),
            transcendentals=int(n * c),
            bytes_accessed=int(n * c * itemsize + 2 * n * 4),
        ),
    )(preds, targets2d)

    # tiny final reduction in the wrapper; divide by the TRUE N (padded rows are 0)
    return jnp.sum(per_row) / jnp.float32(n)


def _reference(preds, targets):
    logp = jax.nn.log_softmax(preds.astype(jnp.float32), axis=-1)
    nll = -jnp.take_along_axis(logp, targets[:, None].astype(jnp.int32), axis=-1)
    return jnp.mean(nll)


if __name__ == "__main__":
    key = jax.random.PRNGKey(0)
    k1, k2, k3, k4 = jax.random.split(key, 4)

    # small case matching the original module's (N, C) logits / (N,) targets
    N, C = 8, 32
    preds = jax.random.normal(k1, (N, C), dtype=jnp.float32)
    targets = jax.random.randint(k2, (N,), 0, C, dtype=jnp.int32)

    loss = cross_entropy(preds, targets)
    jax.block_until_ready(loss)
    ref = _reference(preds, targets)
    assert jnp.allclose(loss, ref, rtol=1e-5, atol=1e-4), (loss, ref)

    # second small case: ragged row tiles, ragged class tiles (online LSE across
    # multiple class tiles) and bf16 logits streamed unpadded through HBM
    N2, C2 = 35, 300
    preds2 = jax.random.normal(k3, (N2, C2), dtype=jnp.float32).astype(jnp.bfloat16)
    targets2 = jax.random.randint(k4, (N2,), 0, C2, dtype=jnp.int32)

    loss2 = cross_entropy(preds2, targets2, block_n=16, block_c=128)
    jax.block_until_ready(loss2)
    ref2 = _reference(preds2, targets2)
    assert jnp.allclose(loss2, ref2, rtol=1e-4, atol=1e-4), (loss2, ref2)

    print("KERNEL_OK")
</pallas_src>

<mosaic_0001>
module attributes {stable_mosaic.version = 11 : i64} {
  func.func @_ce_kernel(%arg0: i32, %arg1: i32, %arg2: memref<8x32xf32, #tpu.memory_space<vmem>>, %arg3: memref<8x1xi32, #tpu.memory_space<vmem>>, %arg4: memref<8x1xf32, #tpu.memory_space<vmem>>, %arg5: memref<8x1xf32, #tpu.memory_space<vmem>>, %arg6: memref<8x1xf32, #tpu.memory_space<vmem>>, %arg7: memref<8x1xf32, #tpu.memory_space<vmem>>) attributes {dimension_semantics = [#tpu.dimension_semantics<parallel>, #tpu.dimension_semantics<arbitrary>], iteration_bounds = array<i64: 1, 1>, scalar_prefetch = 0 : i64, scratch_operands = 3 : i64, tpu.core_type = #tpu.core_type<tc>, window_params = [{transform_indices = @transform_0, window_bounds = array<i64: 8, 32>}, {transform_indices = @transform_1, window_bounds = array<i64: 8, 1>}, {transform_indices = @transform_2, window_bounds = array<i64: 8, 1>}]} {
    %c0_i32 = arith.constant 0 : i32
    %0 = arith.cmpi eq, %arg1, %c0_i32 : i32
    %1 = arith.extui %0 : i1 to i32
    %c0_i32_0 = arith.constant 0 : i32
    %2 = arith.cmpi ne, %1, %c0_i32_0 : i32
    scf.if %2 {
      %cst_23 = arith.constant 0xFF800000 : f32
      %41 = vector.broadcast %cst_23 : f32 to vector<8x1xf32>
      %c0_24 = arith.constant 0 : index
      %c0_25 = arith.constant 0 : index
      %42 = vector.load %arg5[%c0_24, %c0_25] : memref<8x1xf32, #tpu.memory_space<vmem>>, vector<8x1xf32>
      tpu.vector_store %arg5[%c0_24, %c0_25], %41 {strides = array<i32>} : memref<8x1xf32, #tpu.memory_space<vmem>>, vector<8x1xf32>,
      %cst_26 = arith.constant 0.000000e+00 : f32
      %43 = vector.broadcast %cst_26 : f32 to vector<8x1xf32>
      %c0_27 = arith.constant 0 : index
      %c0_28 = arith.constant 0 : index
      %44 = vector.load %arg6[%c0_27, %c0_28] : memref<8x1xf32, #tpu.memory_space<vmem>>, vector<8x1xf32>
      tpu.vector_store %arg6[%c0_27, %c0_28], %43 {strides = array<i32>} : memref<8x1xf32, #tpu.memory_space<vmem>>, vector<8x1xf32>,
      %cst_29 = arith.constant 0.000000e+00 : f32
      %45 = vector.broadcast %cst_29 : f32 to vector<8x1xf32>
      %c0_30 = arith.constant 0 : index
      %c0_31 = arith.constant 0 : index
      %46 = vector.load %arg7[%c0_30, %c0_31] : memref<8x1xf32, #tpu.memory_space<vmem>>, vector<8x1xf32>
      tpu.vector_store %arg7[%c0_30, %c0_31], %45 {strides = array<i32>} : memref<8x1xf32, #tpu.memory_space<vmem>>, vector<8x1xf32>,
    } else {
    }
    %c0 = arith.constant 0 : index
    %c0_1 = arith.constant 0 : index
    %3 = vector.load %arg2[%c0, %c0_1] : memref<8x32xf32, #tpu.memory_space<vmem>>, vector<8x32xf32>
    %c0_2 = arith.constant 0 : index
    %c0_3 = arith.constant 0 : index
    %4 = vector.load %arg3[%c0_2, %c0_3] : memref<8x1xi32, #tpu.memory_space<vmem>>, vector<8x1xi32>
    %5 = tpu.iota {dimensions = array<i32: 1>} : vector<8x32xi32>
    %c0_4 = arith.constant 0 : index
    %c0_5 = arith.constant 0 : index
    %6 = vector.load %arg5[%c0_4, %c0_5] : memref<8x1xf32, #tpu.memory_space<vmem>>, vector<8x1xf32>
    %cst = arith.constant dense<0xFF800000> : vector<8xf32>
    %7 = vector.multi_reduction <maximumf>, %3, %cst [1] : vector<8x32xf32> to vector<8xf32>
    %8 = vector.shape_cast %7 : vector<8xf32> to vector<8x1xf32>
    %9 = arith.maximumf %6, %8 : vector<8x1xf32>
    %cst_6 = arith.constant 0xFF800000 : f32
    %10 = vector.broadcast %cst_6 : f32 to vector<8x1xf32>
    %11 = arith.cmpf oeq, %9, %10 : vector<8x1xf32>
    %cst_7 = arith.constant 0.000000e+00 : f32
    %12 = vector.broadcast %cst_7 : f32 to vector<8x1xf32>
    %13 = arith.select %11, %12, %9 : vector<8x1xi1>, vector<8x1xf32>
    %14 = arith.subf %6, %13 : vector<8x1xf32>
    %15 = math.exp %14 : vector<8x1xf32>
    %16 = vector.broadcast %13 : vector<8x1xf32> to vector<8x32xf32>
    %17 = arith.subf %3, %16 : vector<8x32xf32>
    %18 = math.exp %17 : vector<8x32xf32>
    %c0_8 = arith.constant 0 : index
    %c0_9 = arith.constant 0 : index
    %19 = vector.load %arg6[%c0_8, %c0_9] : memref<8x1xf32, #tpu.memory_space<vmem>>, vector<8x1xf32>
    %20 = arith.mulf %15, %19 : vector<8x1xf32>
    %cst_10 = arith.constant dense<0.000000e+00> : vector<8xf32>
    %21 = vector.multi_reduction <add>, %18, %cst_10 [1] : vector<8x32xf32> to vector<8xf32>
    %22 = vector.shape_cast %21 : vector<8xf32> to vector<8x1xf32>
    %23 = arith.addf %20, %22 : vector<8x1xf32>
    %c0_11 = arith.constant 0 : index
    %c0_12 = arith.constant 0 : index
    %24 = vector.load %arg6[%c0_11, %c0_12] : memref<8x1xf32, #tpu.memory_space<vmem>>, vector<8x1xf32>
    tpu.vector_store %arg6[%c0_11, %c0_12], %23 {strides = array<i32>} : memref<8x1xf32, #tpu.memory_space<vmem>>, vector<8x1xf32>,
    %c0_13 = arith.constant 0 : index
    %c0_14 = arith.constant 0 : index
    %25 = vector.load %arg5[%c0_13, %c0_14] : memref<8x1xf32, #tpu.memory_space<vmem>>, vector<8x1xf32>
    tpu.vector_store %arg5[%c0_13, %c0_14], %9 {strides = array<i32>} : memref<8x1xf32, #tpu.memory_space<vmem>>, vector<8x1xf32>,
    %c32_i32 = arith.constant 32 : i32
    %26 = arith.muli %arg1, %c32_i32 : i32
    %27 = vector.broadcast %26 : i32 to vector<8x1xi32>
    %28 = arith.subi %4, %27 : vector<8x1xi32>
    %c0_15 = arith.constant 0 : index
    %c0_16 = arith.constant 0 : index
    %29 = vector.load %arg7[%c0_15, %c0_16] : memref<8x1xf32, #tpu.memory_space<vmem>>, vector<8x1xf32>
    %30 = vector.broadcast %28 : vector<8x1xi32> to vector<8x32xi32>
    %31 = arith.cmpi eq, %5, %30 : vector<8x32xi32>
    %cst_17 = arith.constant 0.000000e+00 : f32
    %32 = vector.broadcast %cst_17 : f32 to vector<8x32xf32>
    %33 = arith.select %31, %3, %32 : vector<8x32xi1>, vector<8x32xf32>
    %cst_18 = arith.constant dense<0.000000e+00> : vector<8xf32>
    %34 = vector.multi_reduction <add>, %33, %cst_18 [1] : vector<8x32xf32> to vector<8xf32>
    %35 = vector.shape_cast %34 : vector<8xf32> to vector<8x1xf32>
    %36 = arith.addf %29, %35 : vector<8x1xf32>
    %c0_19 = arith.constant 0 : index
    %c0_20 = arith.constant 0 : index
    %37 = vector.load %arg7[%c0_19, %c0_20] : memref<8x1xf32, #tpu.memory_space<vmem>>, vector<8x1xf32>
    tpu.vector_store %arg7[%c0_19, %c0_20], %36 {strides = array<i32>} : memref<8x1xf32, #tpu.memory_space<vmem>>, vector<8x1xf32>,
    %c0_i32_21 = arith.constant 0 : i32
    %38 = arith.cmpi eq, %arg1, %c0_i32_21 : i32
    %39 = arith.extui %38 : i1 to i32
    %c0_i32_22 = arith.constant 0 : i32
    %40 = arith.cmpi ne, %39, %c0_i32_22 : i32
    scf.if %40 {
      %c0_23 = arith.constant 0 : index
      %c0_24 = arith.constant 0 : index
      %41 = vector.load %arg5[%c0_23, %c0_24] : memref<8x1xf32, #tpu.memory_space<vmem>>, vector<8x1xf32>
      %c0_25 = arith.constant 0 : index
      %c0_26 = arith.constant 0 : index
      %42 = vector.load %arg6[%c0_25, %c0_26] : memref<8x1xf32, #tpu.memory_space<vmem>>, vector<8x1xf32>
      %43 = math.log %42 : vector<8x1xf32>
      %44 = arith.addf %41, %43 : vector<8x1xf32>
      %c0_i32_27 = arith.constant 0 : i32
      %45 = vector.broadcast %c0_i32_27 : i32 to vector<8x1xi32>
      %46 = arith.cmpi sge, %4, %45 : vector<8x1xi32>
      %c0_28 = arith.constant 0 : index
      %c0_29 = arith.constant 0 : index
      %47 = vector.load %arg7[%c0_28, %c0_29] : memref<8x1xf32, #tpu.memory_space<vmem>>, vector<8x1xf32>
      %48 = arith.subf %44, %47 : vector<8x1xf32>
      %cst_30 = arith.constant 0.000000e+00 : f32
      %49 = vector.broadcast %cst_30 : f32 to vector<8x1xf32>
      %50 = arith.select %46, %48, %49 : vector<8x1xi1>, vector<8x1xf32>
      %c0_31 = arith.constant 0 : index
      %c0_32 = arith.constant 0 : index
      %51 = vector.load %arg4[%c0_31, %c0_32] : memref<8x1xf32, #tpu.memory_space<vmem>>, vector<8x1xf32>
      tpu.vector_store %arg4[%c0_31, %c0_32], %50 {strides = array<i32>} : memref<8x1xf32, #tpu.memory_space<vmem>>, vector<8x1xf32>,
    } else {
    }
    return
  }
  func.func @transform_0(%arg0: i32, %arg1: i32) -> (i32, i32) {
    %c0_i32 = arith.constant 0 : i32
    return %arg0, %arg1 : i32, i32
  }
  func.func @transform_1(%arg0: i32, %arg1: i32) -> (i32, i32) {
    %c0_i32 = arith.constant 0 : i32
    %c0_i32_0 = arith.constant 0 : i32
    return %arg0, %c0_i32 : i32, i32
  }
  func.func @transform_2(%arg0: i32, %arg1: i32) -> (i32, i32) {
    %c0_i32 = arith.constant 0 : i32
    %c0_i32_0 = arith.constant 0 : i32
    return %arg0, %c0_i32 : i32, i32
  }
}

</mosaic_0001>

<llo_original>
// kernel: tpu_custom_call.1
$region0: #{tpu_custom_call.1}
  #allocation0 [shape = 'u32[]', space=smem, size = 0x4, offset = 0x4, fixed_abs, tag = 'smem constant byte address 0x4 - core index']
  #allocation1 [shape = 'u32[72,128]{1,0:T(1,128)}', space=vmem, size = 0x9000, scoped, tag = 'internal scratch']
  #allocation2 [shape = 'f32[8,1]{1,0:T(8,128)}', space=vmem, size = 0x1000, scoped, tag = 'scratch operand']
  #allocation3 [shape = 'f32[8,1]{1,0:T(8,128)}', space=vmem, size = 0x1000, scoped, tag = 'scratch operand']
  #allocation4 [shape = 'f32[8,1]{1,0:T(8,128)}', space=vmem, size = 0x1000, scoped, tag = 'scratch operand']
  %s0 = inlined_call_operand.vmem [shape: f32[8,32], index: 0, kind: input, shape index: {}]
  %s1 = inlined_call_operand.vmem [shape: s32[8,1], index: 1, kind: input, shape index: {}]
  %s2 = inlined_call_operand.vmem [shape: f32[8,1], index: 2, kind: output, shape index: {}]
  %s3 = sld [smem:[#allocation0]]
  $region26: #{tpu_custom_call.1} parent=0
    _
  %s5 = ssub.s32 1, %s3
  %s6 = scalar_select 0, %s5, %s3
  // Predicated region
  $region2: #{tpu_custom_call.1} parent=0 // pred_check
    _
  $region3: #{tpu_custom_call.1} parent=0 // pred_check_branch
    %8 = sbr.rel (0) target = $region5
  $region4: #{tpu_custom_call.1} parent=0 // pred_region
    _
  $region5: #{tpu_custom_call.1} parent=0 // pred_fallthru
    _
  // Predicated region
  $region6: #{tpu_custom_call.1} parent=0 // pred_check
    _
  $region7: #{tpu_custom_call.1} parent=0 // pred_check_branch
    %10 = sbr.rel (0) target = $region9
  $region8: #{tpu_custom_call.1} parent=0 // pred_region
    _
  $region9: #{tpu_custom_call.1} parent=0 // pred_fallthru
    _
  %p11 = scmp.eq.s32.totalorder 0, 0
  // Predicated region
  $region10: #{tpu_custom_call.1} parent=0 // pred_check
    %p12 = pneg %p11
  $region11: #{tpu_custom_call.1} parent=0 // pred_check_branch
    %14 = sbr.rel (%p12) target = $region13
  $region12: #{tpu_custom_call.1} parent=0 // pred_region
    %vm15 = vcmask 7168
    %16 = vst.msk [vmem:[#allocation2] sm:$0xff] %vm15, -inf
    %17 = vst.msk [vmem:[#allocation3] sm:$0xff] %vm15, 0.0
    %18 = vst.msk [vmem:[#allocation4] sm:$0xff] %vm15, 0.0
  $region13: #{tpu_custom_call.1} parent=0 // pred_fallthru
    _
  %v19 = vld [vmem:[%s0] sm:$0xff]
  %v20 = vld [vmem:[%s1] sm:$0xff]
  %v21 = vlaneseq
  %v22 = vand.u32 %v21, 127
  %v23 = vld [vmem:[#allocation2] sm:$0xff]
  %vm24 = vcmask 261120
  %v25 = vsel %vm24, %v19, -inf
  %26 = vmax.xlane.f32.xlu0 %v25
  %v27 = vpop.xlane.xlu0 %26
  %v28 = vmax.f32 %v23, %v27
  %vm29 = vcmp.eq.f32.partialorder %v28, -inf
  %v30 = vsel %vm29, 0.0, %v28
  %v31 = vsub.f32 %v23, %v30
  %v32 = vmul.f32 %v31, 1.442695
  %v33 = vpow.pop %v32
  %35 = vset.pattern.permute.xlu0 0
  %36 = vperm.xlu0 %35, %v30
  %v37 = vpop.permute.xlu0 %36
  %v39 = vsub.f32 %v19, %v37
  %v40 = vmul.f32 %v39, 1.442695
  %v41 = vpow.pop %v40
  %v42 = vld [vmem:[#allocation3] sm:$0xff]
  %v43 = vmul.f32 %v33, %v42
  %v44 = vsel %vm24, %v41, 0.0
  %45 = vadd.xlane.f32.xlu0 %v44
  %v46 = vpop.xlane.xlu0 %45
  %v47 = vadd.f32 %v43, %v46
  %vm48 = vcmask 7168
  %49 = vst.msk [vmem:[#allocation3] sm:$0xff] %vm48, %v47
  %50 = vst.msk [vmem:[#allocation2] sm:$0xff] %vm48, %v28
  %s51 = smul.u32 0, 32
  %v52 = vstv %s51
  %v53 = vsub.s32 %v20, %v52
  %v54 = vld [vmem:[#allocation4] sm:$0xff]
  %55 = vset.pattern.permute.xlu0 0
  %56 = vperm.xlu0 %55, %v53
  %v57 = vpop.permute.xlu0 %56
  %vm58 = vcmp.eq.s32.totalorder %v22, %v57
  %v59 = vsel %vm58, %v19, 0.0
  %v60 = vsel %vm24, %v59, 0.0
  %61 = vadd.xlane.f32.xlu0 %v60
  %v62 = vpop.xlane.xlu0 %61
  %v63 = vadd.f32 %v54, %v62
  %64 = vst.msk [vmem:[#allocation4] sm:$0xff] %vm48, %v63
  // Predicated region
  $region14: #{tpu_custom_call.1} parent=0 // pred_check
    %p65 = pneg %p11
  $region15: #{tpu_custom_call.1} parent=0 // pred_check_branch
    %67 = sbr.rel (%p65) target = $region17
  $region16: #{tpu_custom_call.1} parent=0 // pred_region
    %v68 = vld [vmem:[#allocation2] sm:$0xff]
    %v69 = vld [vmem:[#allocation3] sm:$0xff]
    %v70 = vlog2.pop %v69
    %v71 = vmul.f32 %v70, 0.6931472
    %v72 = vadd.f32 %v68, %v71
    %vm73 = vcmp.ge.s32.totalorder %v20, 0
    %v74 = vld [vmem:[#allocation4] sm:$0xff]
    %v75 = vsub.f32 %v72, %v74
    %v76 = vsel %vm73, %v75, 0.0
    %77 = vst.msk [vmem:[%s2] sm:$0xff] %vm48, %v76
  $region17: #{tpu_custom_call.1} parent=0 // pred_fallthru
    _
  // Predicated region
  $region18: #{tpu_custom_call.1} parent=0 // pred_check
    _
  $region19: #{tpu_custom_call.1} parent=0 // pred_check_branch
    %79 = sbr.rel (0) target = $region21
  $region20: #{tpu_custom_call.1} parent=0 // pred_region
    _
  $region21: #{tpu_custom_call.1} parent=0 // pred_fallthru
    _
  // Predicated region
  $region22: #{tpu_custom_call.1} parent=0 // pred_check
    _
  $region23: #{tpu_custom_call.1} parent=0 // pred_check_branch
    %81 = sbr.rel (0) target = $region25
  $region24: #{tpu_custom_call.1} parent=0 // pred_region
    _
  $region25: #{tpu_custom_call.1} parent=0 // pred_fallthru
    _

</llo_original>
